<compile_context>
chip_gen: v7x
topology: tpu7x:2x2x1
jax: 0.10.0
libtpu: 0.0.40
codegen_flags: <defaults>
</compile_context>

<pallas_src>
import functools

import jax
import jax.numpy as jnp
from jax import lax
from jax.experimental import pallas as pl
from jax.experimental.pallas import tpu as pltpu

NUM_CLASSES = 4
FOCAL_ALPHA = 0.25
FOCAL_GAMMA = 2.0  # hard-coded as an explicit square inside the kernel


def _round_up(x, m):
    return (x + m - 1) // m * m


def _focal_sum_kernel(x_ref, t_ref, out_ref, acc_ref, *, alpha, num_classes,
                      block_rows, steps, total_valid):
    """Grid = (n_split, steps). Accumulates per-split focal-loss partial sums.

    x_ref  : (block_rows, 128) logits tile (lane-dense flattening of [N, C]).
    t_ref  : (block_rows, 128) int8 tile of matched class ids per element.
    out_ref: (8, 128) f32 per-split partial sums (scalar-reduced by the wrapper).
    acc_ref: (8, 128) f32 VMEM accumulator (one vreg), persists across the inner axis.
    """
    i = pl.program_id(1)

    @pl.when(i == 0)
    def _init():
        acc_ref[...] = jnp.zeros_like(acc_ref)

    x = x_ref[...].astype(jnp.float32)
    tid = t_ref[...].astype(jnp.int32)

    shape = (block_rows, 128)
    row = lax.broadcasted_iota(jnp.int32, shape, 0)
    lane = lax.broadcasted_iota(jnp.int32, shape, 1)
    tile = pl.program_id(0) * steps + i
    gidx = tile * (block_rows * 128) + row * 128 + lane   # global flat element index
    valid = gidx < total_valid                            # mask the padded tail

    # Build the one-hot target in-kernel: flat element f targets class (f % C).
    if 128 % num_classes == 0:
        cls = lane % num_classes
    else:
        cls = gidx % num_classes
    t = (tid == cls).astype(jnp.float32)

    # Sigmoid focal loss (gamma == 2), sharing a single exp:
    #   e = exp(-|x|); sigmoid(x) = where(x>=0, 1/(1+e), e/(1+e))
    #   bce = max(x,0) - x*t + log1p(e);  loss = alpha_t * (1-p_t)^2 * bce
    e = jnp.exp(-jnp.abs(x))
    inv_1pe = pl.reciprocal(1.0 + e, approx=False)
    sig_neg = e * inv_1pe                                 # sigmoid(-|x|)
    prob = jnp.where(x >= 0.0, 1.0 - sig_neg, sig_neg)    # sigmoid(x)
    bce = jnp.maximum(x, 0.0) - x * t + jnp.log1p(e)
    p_t = prob * t + (1.0 - prob) * (1.0 - t)
    one_minus_pt = 1.0 - p_t
    loss = bce * (one_minus_pt * one_minus_pt)            # gamma == 2 -> explicit square
    alpha_t = alpha * t + (1.0 - alpha) * (1.0 - t)
    loss = alpha_t * loss
    loss = jnp.where(valid, loss, 0.0)

    # Fold (block_rows,128) -> (8,128) with aligned static slices: pure VPU adds, no XLU.
    partial = loss[0:8, :]
    for k in range(1, block_rows // 8):
        partial = partial + loss[k * 8:(k + 1) * 8, :]
    acc_ref[...] += partial

    @pl.when(i == steps - 1)
    def _finalize():
        out_ref[...] = acc_ref[...]


def sigmoid_focal_loss_sum(logits_flat, class_ids_flat_i8, *, num_classes,
                           max_block_rows=512):
    """Sum over all elements of the sigmoid focal loss (gamma=2), computed in Pallas.

    logits_flat       : [N*C] float  — pred_logits flattened row-major (class fastest).
    class_ids_flat_i8 : [N*C] int8   — matched class id of the query owning each element.
                        Element at flat index f has target 1.0 iff class_ids[f] == f % C.
    """
    total_valid = logits_flat.shape[0]
    assert class_ids_flat_i8.shape[0] == total_valid

    # Lane-dense layout: [rows, 128]; every vreg full.
    rows = -(-total_valid // 128)
    # block_rows multiple of 32 satisfies both the f32 (8,128) and int8 (32,128) tilings.
    block_rows = min(_round_up(max_block_rows, 32), _round_up(rows, 32))
    tiles = -(-rows // block_rows)
    # Leading "parallel" axis of size 2 lets v7x megacore use both TensorCores; it runs
    # sequentially (and correctly) on single-core chips.
    n_split = 2 if tiles >= 2 else 1
    tiles = _round_up(tiles, n_split)
    steps = tiles // n_split
    padded_rows = tiles * block_rows
    pad = padded_rows * 128 - total_valid

    x2 = jnp.pad(logits_flat, (0, pad)).reshape(padded_rows, 128)
    t2 = jnp.pad(class_ids_flat_i8, (0, pad)).reshape(padded_rows, 128)

    kernel = functools.partial(
        _focal_sum_kernel,
        alpha=FOCAL_ALPHA,
        num_classes=num_classes,
        block_rows=block_rows,
        steps=steps,
        total_valid=total_valid,
    )

    n_elems = padded_rows * 128
    out = pl.pallas_call(
        kernel,
        out_shape=jax.ShapeDtypeStruct((n_split * 8, 128), jnp.float32),
        grid_spec=pltpu.PrefetchScalarGridSpec(
            num_scalar_prefetch=0,
            grid=(n_split, steps),
            in_specs=[
                pl.BlockSpec((block_rows, 128), lambda s, i: (s * steps + i, 0)),
                pl.BlockSpec((block_rows, 128), lambda s, i: (s * steps + i, 0)),
            ],
            out_specs=pl.BlockSpec((8, 128), lambda s, i: (s, 0)),
            scratch_shapes=[pltpu.VMEM((8, 128), jnp.float32)],
        ),
        compiler_params=pltpu.CompilerParams(
            dimension_semantics=("parallel", "arbitrary"),
        ),
        cost_estimate=pl.CostEstimate(
            flops=20 * n_elems,
            transcendentals=3 * n_elems,
            bytes_accessed=n_elems * (logits_flat.dtype.itemsize + 1)
            + n_split * 8 * 128 * 4,
        ),
    )(x2, t2)
    # Per-split (8,128) partial sums -> scalar (tiny XLA reduce in the wrapper).
    return jnp.sum(out)


def _focal_sum_xla(logits, onehot, alpha=FOCAL_ALPHA, gamma=FOCAL_GAMMA):
    """Plain-XLA focal-loss sum, used below the kernel-dispatch threshold."""
    x = logits.astype(jnp.float32)
    t = onehot.astype(jnp.float32)
    prob = jax.nn.sigmoid(x)
    bce = jnp.maximum(x, 0.0) - x * t + jnp.log1p(jnp.exp(-jnp.abs(x)))
    p_t = prob * t + (1.0 - prob) * (1.0 - t)
    loss = bce * ((1.0 - p_t) ** gamma)
    alpha_t = alpha * t + (1.0 - alpha) * (1.0 - t)
    return jnp.sum(alpha_t * loss)


def set_arctic_criterion_forward(pred_logits, target_labels, target_counts, *,
                                 min_kernel_elements=65536, max_block_rows=512):
    """Forward pass of SetArcticCriterion (labels / focal loss).

    pred_logits   : [B, Q, C] float
    target_labels : [B, Q]    int32 class ids (padded; first target_counts[b] are valid)
    target_counts : [B]       int32 number of GT boxes per image
    """
    B, Q, C = pred_logits.shape

    # num_boxes = clamp(sum of gt boxes, min=1)
    # TODO(synk): torch.distributed all_reduce of num_boxes is not translated (world size 1).
    num_boxes = jnp.maximum(jnp.sum(target_counts).astype(jnp.float32), 1.0)

    # TODO(synk): Hungarian matcher has no clean Pallas equivalent; identity matching
    # (target j <-> query j for the first target_counts[b] queries) is used instead.
    q_idx = jnp.arange(Q, dtype=jnp.int32)
    valid = q_idx[None, :] < target_counts[:, None]
    target_classes = jnp.where(valid, target_labels, C).astype(jnp.int32)  # C == "no object"

    total_elems = B * Q * C
    if total_elems >= min_kernel_elements:
        x_flat = pred_logits.reshape(-1)
        tid_flat = jnp.broadcast_to(
            target_classes[:, :, None], (B, Q, C)).astype(jnp.int8).reshape(-1)
        total = sigmoid_focal_loss_sum(
            x_flat, tid_flat, num_classes=C, max_block_rows=max_block_rows)
    else:
        # Kernel launch overhead would dominate for tiny shapes; use fused XLA instead.
        onehot = jax.nn.one_hot(target_classes, C + 1, dtype=jnp.float32)[..., :C]
        total = _focal_sum_xla(pred_logits, onehot)

    # loss.mean(1).sum() / num_boxes * Q  ==  total / num_boxes
    loss_ce = total / num_boxes
    return {"loss_ce": loss_ce}


def _reference_loss_ce(pred_logits, target_labels, target_counts):
    """Pure-JAX reference mirroring the PyTorch semantics, for verification."""
    B, Q, C = pred_logits.shape
    num_boxes = jnp.maximum(jnp.sum(target_counts).astype(jnp.float32), 1.0)
    q_idx = jnp.arange(Q)
    valid = q_idx[None, :] < target_counts[:, None]
    target_classes = jnp.where(valid, target_labels, C)
    t = jax.nn.one_hot(target_classes, C + 1, dtype=jnp.float32)[..., :C]
    x = pred_logits.astype(jnp.float32)
    prob = jax.nn.sigmoid(x)
    bce = jnp.maximum(x, 0.0) - x * t + jnp.log1p(jnp.exp(-jnp.abs(x)))
    p_t = prob * t + (1.0 - prob) * (1.0 - t)
    loss = bce * ((1.0 - p_t) ** FOCAL_GAMMA)
    alpha_t = FOCAL_ALPHA * t + (1.0 - FOCAL_ALPHA) * (1.0 - t)
    loss = alpha_t * loss
    return jnp.mean(loss, axis=1).sum() / num_boxes * Q


if __name__ == "__main__":
    key = jax.random.PRNGKey(0)
    k1, k2, k3, k4 = jax.random.split(key, 4)

    # Case 1: small shape consistent with the module (B=2 images, Q=64 queries, C=4).
    B, Q, C = 2, 64, NUM_CLASSES
    pred_logits = jax.random.normal(k1, (B, Q, C), dtype=jnp.float32)
    target_labels = jax.random.randint(k2, (B, Q), 0, C, dtype=jnp.int32)
    target_counts = jnp.array([5, 3], dtype=jnp.int32)

    losses = set_arctic_criterion_forward(
        pred_logits, target_labels, target_counts, min_kernel_elements=0)
    loss_ce = jax.block_until_ready(losses["loss_ce"])
    ref = _reference_loss_ce(pred_logits, target_labels, target_counts)
    assert jnp.allclose(loss_ce, ref, atol=1e-6, rtol=1e-3), (loss_ce, ref)

    # Case 2: exercises the multi-tile path — 2-way "parallel" split, multiple inner
    # steps and masking of the padded tail — by shrinking max_block_rows.
    B2, Q2 = 2, 2000
    pl2 = jax.random.normal(k3, (B2, Q2, C), dtype=jnp.float32)
    tl2 = jax.random.randint(k4, (B2, Q2), 0, C, dtype=jnp.int32)
    tc2 = jnp.array([37, 11], dtype=jnp.int32)
    losses2 = set_arctic_criterion_forward(
        pl2, tl2, tc2, min_kernel_elements=0, max_block_rows=32)
    l2 = jax.block_until_ready(losses2["loss_ce"])
    ref2 = _reference_loss_ce(pl2, tl2, tc2)
    assert jnp.allclose(l2, ref2, atol=1e-6, rtol=1e-3), (l2, ref2)

    # Case 3: tiny-size fallback path (plain XLA, no kernel) sanity check.
    losses3 = set_arctic_criterion_forward(pred_logits, target_labels, target_counts)
    l3 = jax.block_until_ready(losses3["loss_ce"])
    assert jnp.allclose(l3, ref, atol=1e-6, rtol=1e-3), (l3, ref)

    print("KERNEL_OK")
</pallas_src>

<mosaic_0001>
module attributes {stable_mosaic.version = 11 : i64} {
  func.func @_focal_sum_kernel(%arg0: i32, %arg1: i32, %arg2: memref<32x128xf32, #tpu.memory_space<vmem>>, %arg3: memref<32x128xi8, #tpu.memory_space<vmem>>, %arg4: memref<8x128xf32, #tpu.memory_space<vmem>>, %arg5: memref<8x128xf32, #tpu.memory_space<vmem>>) attributes {dimension_semantics = [#tpu.dimension_semantics<parallel>, #tpu.dimension_semantics<arbitrary>], iteration_bounds = array<i64: 1, 1>, scalar_prefetch = 0 : i64, scratch_operands = 1 : i64, tpu.core_type = #tpu.core_type<tc>, window_params = [{transform_indices = @transform_0, window_bounds = array<i64: 32, 128>}, {transform_indices = @transform_1, window_bounds = array<i64: 32, 128>}, {transform_indices = @transform_2, window_bounds = array<i64: 8, 128>}]} {
    %c0_i32 = arith.constant 0 : i32
    %0 = arith.cmpi eq, %arg1, %c0_i32 : i32
    %1 = arith.extui %0 : i1 to i32
    %c0_i32_0 = arith.constant 0 : i32
    %2 = arith.cmpi ne, %1, %c0_i32_0 : i32
    scf.if %2 {
      %cst_26 = arith.constant 0.000000e+00 : f32
      %90 = vector.broadcast %cst_26 : f32 to vector<8x128xf32>
      %c0_27 = arith.constant 0 : index
      %c0_28 = arith.constant 0 : index
      %91 = vector.load %arg5[%c0_27, %c0_28] : memref<8x128xf32, #tpu.memory_space<vmem>>, vector<8x128xf32>
      tpu.vector_store %arg5[%c0_27, %c0_28], %90 {strides = array<i32>} : memref<8x128xf32, #tpu.memory_space<vmem>>, vector<8x128xf32>,
    } else {
    }
    %c0 = arith.constant 0 : index
    %c0_1 = arith.constant 0 : index
    %3 = vector.load %arg2[%c0, %c0_1] : memref<32x128xf32, #tpu.memory_space<vmem>>, vector<32x128xf32>
    %c0_2 = arith.constant 0 : index
    %c0_3 = arith.constant 0 : index
    %4 = vector.load %arg3[%c0_2, %c0_3] : memref<32x128xi8, #tpu.memory_space<vmem>>, vector<32x128xi8>
    %5 = arith.extsi %4 : vector<32x128xi8> to vector<32x128xi32>
    %6 = tpu.iota {dimensions = array<i32: 0>} : vector<32x128xi32>
    %7 = tpu.iota {dimensions = array<i32: 1>} : vector<32x128xi32>
    %c1_i32 = arith.constant 1 : i32
    %8 = arith.muli %arg0, %c1_i32 : i32
    %9 = arith.addi %8, %arg1 : i32
    %c4096_i32 = arith.constant 4096 : i32
    %10 = arith.muli %9, %c4096_i32 : i32
    %c128_i32 = arith.constant 128 : i32
    %11 = vector.broadcast %c128_i32 : i32 to vector<32x128xi32>
    %12 = arith.muli %6, %11 : vector<32x128xi32>
    %13 = vector.broadcast %10 : i32 to vector<32x128xi32>
    %14 = arith.addi %13, %12 : vector<32x128xi32>
    %15 = arith.addi %14, %7 : vector<32x128xi32>
    %c512_i32 = arith.constant 512 : i32
    %16 = vector.broadcast %c512_i32 : i32 to vector<32x128xi32>
    %17 = arith.cmpi slt, %15, %16 : vector<32x128xi32>
    %c4_i32 = arith.constant 4 : i32
    %c0_i32_4 = arith.constant 0 : i32
    %18 = arith.cmpi eq, %c4_i32, %c0_i32_4 : i32
    %c1_i32_5 = arith.constant 1 : i32
    %19 = arith.select %18, %c1_i32_5, %c4_i32 : i32
    %20 = vector.broadcast %19 : i32 to vector<32x128xi32>
    %21 = arith.remsi %7, %20 : vector<32x128xi32>
    %c0_i32_6 = arith.constant 0 : i32
    %22 = vector.broadcast %c0_i32_6 : i32 to vector<32x128xi32>
    %23 = arith.cmpi ne, %21, %22 : vector<32x128xi32>
    %c0_i32_7 = arith.constant 0 : i32
    %24 = vector.broadcast %c0_i32_7 : i32 to vector<32x128xi32>
    %25 = arith.cmpi slt, %21, %24 : vector<32x128xi32>
    %c0_i32_8 = arith.constant 0 : i32
    %26 = arith.cmpi slt, %19, %c0_i32_8 : i32
    %27 = vector.broadcast %26 : i1 to vector<32x128xi1>
    %28 = vector.broadcast %27 : vector<32x128xi1> to vector<32x128xi1>
    %29 = arith.xori %25, %28 : vector<32x128xi1>
    %30 = arith.andi %29, %23 : vector<32x128xi1>
    %31 = vector.broadcast %19 : i32 to vector<32x128xi32>
    %32 = arith.addi %21, %31 : vector<32x128xi32>
    %33 = arith.select %30, %32, %21 : vector<32x128xi1>, vector<32x128xi32>
    %34 = arith.cmpi eq, %5, %33 : vector<32x128xi32>
    %35 = arith.extui %34 : vector<32x128xi1> to vector<32x128xi32>
    %36 = arith.sitofp %35 : vector<32x128xi32> to vector<32x128xf32>
    %37 = math.absf %3 : vector<32x128xf32>
    %cst = arith.constant 0.000000e+00 : f32
    %38 = vector.broadcast %cst : f32 to vector<32x128xf32>
    %39 = arith.subf %38, %37 : vector<32x128xf32>
    %40 = math.exp %39 : vector<32x128xf32>
    %cst_9 = arith.constant 1.000000e+00 : f32
    %41 = vector.broadcast %cst_9 : f32 to vector<32x128xf32>
    %42 = arith.addf %41, %40 : vector<32x128xf32>
    %43 = tpu.reciprocal %42 : vector<32x128xf32> -> vector<32x128xf32>
    %44 = arith.mulf %40, %43 : vector<32x128xf32>
    %cst_10 = arith.constant 0.000000e+00 : f32
    %45 = vector.broadcast %cst_10 : f32 to vector<32x128xf32>
    %46 = arith.cmpf oge, %3, %45 : vector<32x128xf32>
    %cst_11 = arith.constant 1.000000e+00 : f32
    %47 = vector.broadcast %cst_11 : f32 to vector<32x128xf32>
    %48 = arith.subf %47, %44 : vector<32x128xf32>
    %49 = arith.select %46, %48, %44 : vector<32x128xi1>, vector<32x128xf32>
    %cst_12 = arith.constant 0.000000e+00 : f32
    %50 = vector.broadcast %cst_12 : f32 to vector<32x128xf32>
    %51 = arith.maximumf %3, %50 : vector<32x128xf32>
    %52 = arith.mulf %3, %36 : vector<32x128xf32>
    %53 = arith.subf %51, %52 : vector<32x128xf32>
    %54 = math.log1p %40 : vector<32x128xf32>
    %55 = arith.addf %53, %54 : vector<32x128xf32>
    %56 = arith.mulf %49, %36 : vector<32x128xf32>
    %cst_13 = arith.constant 1.000000e+00 : f32
    %57 = vector.broadcast %cst_13 : f32 to vector<32x128xf32>
    %58 = arith.subf %57, %49 : vector<32x128xf32>
    %cst_14 = arith.constant 1.000000e+00 : f32
    %59 = vector.broadcast %cst_14 : f32 to vector<32x128xf32>
    %60 = arith.subf %59, %36 : vector<32x128xf32>
    %61 = arith.mulf %58, %60 : vector<32x128xf32>
    %62 = arith.addf %56, %61 : vector<32x128xf32>
    %cst_15 = arith.constant 1.000000e+00 : f32
    %63 = vector.broadcast %cst_15 : f32 to vector<32x128xf32>
    %64 = arith.subf %63, %62 : vector<32x128xf32>
    %65 = arith.mulf %64, %64 : vector<32x128xf32>
    %66 = arith.mulf %55, %65 : vector<32x128xf32>
    %cst_16 = arith.constant 2.500000e-01 : f32
    %67 = vector.broadcast %cst_16 : f32 to vector<32x128xf32>
    %68 = arith.mulf %67, %36 : vector<32x128xf32>
    %cst_17 = arith.constant 1.000000e+00 : f32
    %69 = vector.broadcast %cst_17 : f32 to vector<32x128xf32>
    %70 = arith.subf %69, %36 : vector<32x128xf32>
    %cst_18 = arith.constant 7.500000e-01 : f32
    %71 = vector.broadcast %cst_18 : f32 to vector<32x128xf32>
    %72 = arith.mulf %71, %70 : vector<32x128xf32>
    %73 = arith.addf %68, %72 : vector<32x128xf32>
    %74 = arith.mulf %73, %66 : vector<32x128xf32>
    %cst_19 = arith.constant 0.000000e+00 : f32
    %75 = vector.broadcast %cst_19 : f32 to vector<32x128xf32>
    %76 = arith.select %17, %74, %75 : vector<32x128xi1>, vector<32x128xf32>
    %77 = vector.extract_strided_slice %76 {offsets = [0, 0], sizes = [8, 128], strides = [1, 1]} : vector<32x128xf32> to vector<8x128xf32>
    %78 = vector.extract_strided_slice %76 {offsets = [8, 0], sizes = [8, 128], strides = [1, 1]} : vector<32x128xf32> to vector<8x128xf32>
    %79 = arith.addf %77, %78 : vector<8x128xf32>
    %80 = vector.extract_strided_slice %76 {offsets = [16, 0], sizes = [8, 128], strides = [1, 1]} : vector<32x128xf32> to vector<8x128xf32>
    %81 = arith.addf %79, %80 : vector<8x128xf32>
    %82 = vector.extract_strided_slice %76 {offsets = [24, 0], sizes = [8, 128], strides = [1, 1]} : vector<32x128xf32> to vector<8x128xf32>
    %83 = arith.addf %81, %82 : vector<8x128xf32>
    %c0_20 = arith.constant 0 : index
    %c0_21 = arith.constant 0 : index
    %84 = vector.load %arg5[%c0_20, %c0_21] : memref<8x128xf32, #tpu.memory_space<vmem>>, vector<8x128xf32>
    %85 = arith.addf %84, %83 : vector<8x128xf32>
    %c0_22 = arith.constant 0 : index
    %c0_23 = arith.constant 0 : index
    %86 = vector.load %arg5[%c0_22, %c0_23] : memref<8x128xf32, #tpu.memory_space<vmem>>, vector<8x128xf32>
    tpu.vector_store %arg5[%c0_22, %c0_23], %85 {strides = array<i32>} : memref<8x128xf32, #tpu.memory_space<vmem>>, vector<8x128xf32>,
    %c0_i32_24 = arith.constant 0 : i32
    %87 = arith.cmpi eq, %arg1, %c0_i32_24 : i32
    %88 = arith.extui %87 : i1 to i32
    %c0_i32_25 = arith.constant 0 : i32
    %89 = arith.cmpi ne, %88, %c0_i32_25 : i32
    scf.if %89 {
      %c0_26 = arith.constant 0 : index
      %c0_27 = arith.constant 0 : index
      %90 = vector.load %arg5[%c0_26, %c0_27] : memref<8x128xf32, #tpu.memory_space<vmem>>, vector<8x128xf32>
      %c0_28 = arith.constant 0 : index
      %c0_29 = arith.constant 0 : index
      %91 = vector.load %arg4[%c0_28, %c0_29] : memref<8x128xf32, #tpu.memory_space<vmem>>, vector<8x128xf32>
      tpu.vector_store %arg4[%c0_28, %c0_29], %90 {strides = array<i32>} : memref<8x128xf32, #tpu.memory_space<vmem>>, vector<8x128xf32>,
    } else {
    }
    return
  }
  func.func @transform_0(%arg0: i32, %arg1: i32) -> (i32, i32) {
    %c1_i32 = arith.constant 1 : i32
    %0 = arith.muli %arg0, %c1_i32 : i32
    %1 = arith.addi %0, %arg1 : i32
    %c0_i32 = arith.constant 0 : i32
    %c0_i32_0 = arith.constant 0 : i32
    return %1, %c0_i32 : i32, i32
  }
  func.func @transform_1(%arg0: i32, %arg1: i32) -> (i32, i32) {
    %c1_i32 = arith.constant 1 : i32
    %0 = arith.muli %arg0, %c1_i32 : i32
    %1 = arith.addi %0, %arg1 : i32
    %c0_i32 = arith.constant 0 : i32
    %c0_i32_0 = arith.constant 0 : i32
    return %1, %c0_i32 : i32, i32
  }
  func.func @transform_2(%arg0: i32, %arg1: i32) -> (i32, i32) {
    %c0_i32 = arith.constant 0 : i32
    %c0_i32_0 = arith.constant 0 : i32
    return %arg0, %c0_i32 : i32, i32
  }
}

</mosaic_0001>

<llo_original>
// kernel: tpu_custom_call.1
$region0: #{tpu_custom_call.1}
  #allocation0 [shape = 'u32[]', space=smem, size = 0x4, offset = 0x4, fixed_abs, tag = 'smem constant byte address 0x4 - core index']
  #allocation1 [shape = 'u32[144,128]{1,0:T(1,128)}', space=vmem, size = 0x12000, scoped, tag = 'internal scratch']
  #allocation2 [shape = 'f32[8,128]{1,0:T(8,128)}', space=vmem, size = 0x1000, scoped, tag = 'scratch operand']
  %s0 = inlined_call_operand.hbm [shape: f32[32,128], index: 0, kind: input, shape index: {}]
  %s1 = inlined_call_operand.hbm [shape: s8[32,128], index: 1, kind: input, shape index: {}]
  %s2 = inlined_call_operand.hbm [shape: f32[8,128], index: 2, kind: output, shape index: {}]
  %s3 = sld [smem:[#allocation0]]
  $region34: #{tpu_custom_call.1} parent=0
    _
  %s5 = ssub.s32 1, %s3
  %s6 = scalar_select 0, %s5, %s3
  $region1: #{tpu_custom_call.1} parent=0
    #allocation3 [shape = 'u8[16384]{0}', space=vmem, size = 0x4000, scoped, tag = 'input window, operand 0, single buffered']
    #allocation4 [shape = 's32[1]{0}', space=sflag, size = 0x4, scoped, tag = 'scoped memory for tpu_custom_call.1']
    #allocation5 [shape = 's32[1]{0}', space=sflag, size = 0x4, scoped, tag = 'scoped memory for tpu_custom_call.1']
    #allocation6 [shape = 'u8[4096]{0}', space=vmem, size = 0x1000, scoped, tag = 'input window, operand 1, single buffered']
    #allocation7 [shape = 's32[1]{0}', space=sflag, size = 0x4, scoped, tag = 'scoped memory for tpu_custom_call.1']
    #allocation8 [shape = 'u8[4096]{0}', space=vmem, size = 0x1000, scoped, tag = 'output window, operand 0, single buffered']
    %7 = vsyncpa [#allocation4], 0
    %8 = vsyncpa [#allocation7], 0
    %9 = vsyncpa [#allocation5], 0
    // Predicated region
    $region2: #{tpu_custom_call.1} parent=1 // pred_check
      _
    $region3: #{tpu_custom_call.1} parent=1 // pred_check_branch
      %11 = sbr.rel (0) target = $region5
    $region4: #{tpu_custom_call.1} parent=1 // pred_region
      %s12 = sadd.s32 0, 0
      %s13 = smul.u32 4, %s12
      %s15 = ssub.s32 512, 512
      %16 = vsyncadd [#allocation4], %s15
      %s17 = smul.addr %s13, 128
      %s18 = scalar_lea.hbm %s0, %s17
      %s19 = sshll.u32 [#allocation3], 4
      %s20 = int_to_ptr.vmem [resolvable:$true] %s19
      %25 = dma.hbm_to_vmem [thread:$0]  %s18, 512, %s20, [#allocation4], 128, 128, 8
    $region5: #{tpu_custom_call.1} parent=1 // pred_fallthru
      _
    // Predicated region
    $region6: #{tpu_custom_call.1} parent=1 // pred_check
      _
    $region7: #{tpu_custom_call.1} parent=1 // pred_check_branch
      %27 = sbr.rel (0) target = $region9
    $region8: #{tpu_custom_call.1} parent=1 // pred_region
      %s28 = sadd.s32 0, 0
      %s30 = ssub.s32 128, 128
      %31 = vsyncadd [#allocation7], %s30
      %s32 = smul.addr %s28, 128
      %s33 = scalar_lea.hbm %s1, %s32
      %s35 = sshll.u32 [#allocation6], 4
      %s36 = int_to_ptr.vmem [resolvable:$true] %s35
      %38 = dma.hbm_to_vmem [thread:$0]  %s33, 128, %s36, [#allocation7]
    $region9: #{tpu_custom_call.1} parent=1 // pred_fallthru
      _
    // Predicated region
    $region10: #{tpu_custom_call.1} parent=1 // pred_check
      _
    $region11: #{tpu_custom_call.1} parent=1 // pred_check_branch
      %40 = sbr.rel (0) target = $region13
    $region12: #{tpu_custom_call.1} parent=1 // pred_region
      %41 = dma.done [#allocation4], 512
    $region13: #{tpu_custom_call.1} parent=1 // pred_fallthru
      _
    // Predicated region
    $region14: #{tpu_custom_call.1} parent=1 // pred_check
      _
    $region15: #{tpu_custom_call.1} parent=1 // pred_check_branch
      %43 = sbr.rel (0) target = $region17
    $region16: #{tpu_custom_call.1} parent=1 // pred_region
      %44 = dma.done [#allocation7], 128
    $region17: #{tpu_custom_call.1} parent=1 // pred_fallthru
      _
    %s45 = sadd.s32 0, 0
    %s46 = smul.u32 4, %s45
    %s47 = sadd.s32 0, 0
    %p48 = scmp.eq.s32.totalorder 0, 0
    // Predicated region
    $region18: #{tpu_custom_call.1} parent=1 // pred_check
      %p49 = pneg %p48
    $region19: #{tpu_custom_call.1} parent=1 // pred_check_branch
      %51 = sbr.rel (%p49) target = $region21
    $region20: #{tpu_custom_call.1} parent=1 // pred_region
      %52 = vst [vmem:[#allocation2] sm:$0xff] 0.0
    $region21: #{tpu_custom_call.1} parent=1 // pred_fallthru
      _
    %v53 = vld [vmem:[#allocation3] sm:$0xff]
    %v54 = vld [vmem:[#allocation3 + $0x8] sm:$0xff]
    %v55 = vld [vmem:[#allocation3 + $0x10] sm:$0xff]
    %v56 = vld [vmem:[#allocation3 + $0x18] sm:$0xff]
    %v57 = vld [vmem:[#allocation6] sm:$0xff]
    %v58 = vunpack.c.0.s8 %v57
    %v59 = vunpack.c.1.s8 %v57
    %v60 = vunpack.c.2.s8 %v57
    %v61 = vunpack.c.3.s8 %v57
    %v62 = vlaneseq
    %v63 = vshrl.u32 %v62, 7
    %v64 = vadd.s32 %v63, 8
    %v65 = vadd.s32 %v63, 16
    %v66 = vadd.s32 %v63, 24
    %v67 = vlaneseq
    %v68 = vand.u32 %v67, 127
    %s69 = sadd.s32 0, 0
    %s70 = smul.u32 %s69, 4096
    %v71 = vmul.u32 %v63, 128
    %v72 = vmul.u32 %v64, 128
    %v73 = vmul.u32 %v65, 128
    %v74 = vmul.u32 %v66, 128
    %v75 = vstv %s70
    %v76 = vadd.s32 %v75, %v71
    %v77 = vadd.s32 %v75, %v72
    %v78 = vadd.s32 %v75, %v73
    %v79 = vadd.s32 %v75, %v74
    %v80 = vadd.s32 %v76, %v68
    %v81 = vadd.s32 %v77, %v68
    %v82 = vadd.s32 %v78, %v68
    %v83 = vadd.s32 %v79, %v68
    %vm84 = vcmp.lt.s32.totalorder %v80, 512
    %vm85 = vcmp.lt.s32.totalorder %v81, 512
    %vm86 = vcmp.lt.s32.totalorder %v82, 512
    %vm87 = vcmp.lt.s32.totalorder %v83, 512
    %vm88 = vcmp.lt.s32.totalorder %v68, 0
    %v89 = vsub.s32 0, %v68
    %v90 = vsel %vm88, %v89, %v68
    %v91 = vshrl.u32 %v90, 2
    %v92 = vand.u32 %v90, 3
    %v93 = vsub.s32 0, %v92
    %v94 = vsel %vm88, %v93, %v92
    %vm95 = vcmp.ne.s32.totalorder %v94, 0
    %vm96 = vcmp.lt.s32.totalorder %v94, 0
    %vm97 = vmand %vm96, %vm95
    %v98 = vadd.s32 %v94, 4
    %v99 = vsel %vm97, %v98, %v94
    %vm100 = vcmp.eq.s32.totalorder %v58, %v99
    %vm101 = vcmp.eq.s32.totalorder %v59, %v99
    %vm102 = vcmp.eq.s32.totalorder %v60, %v99
    %vm103 = vcmp.eq.s32.totalorder %v61, %v99
    %v104 = vsel %vm100, 1, 0
    %v105 = vsel %vm101, 1, 0
    %v106 = vsel %vm102, 1, 0
    %v107 = vsel %vm103, 1, 0
    %v108 = vcvt.s32.f32 %v104
    %v109 = vcvt.s32.f32 %v105
    %v110 = vcvt.s32.f32 %v106
    %v111 = vcvt.s32.f32 %v107
    %v112 = vand.u32 2147483647, %v53
    %v113 = vand.u32 2147483647, %v54
    %v114 = vand.u32 2147483647, %v55
    %v115 = vand.u32 2147483647, %v56
    %v116 = vsub.f32 0.0, %v112
    %v117 = vsub.f32 0.0, %v113
    %v118 = vsub.f32 0.0, %v114
    %v119 = vsub.f32 0.0, %v115
    %v120 = vmul.f32 %v116, 1.442695
    %v121 = vpow.pop %v120
    %v122 = vmul.f32 %v117, 1.442695
    %v123 = vpow.pop %v122
    %v124 = vmul.f32 %v118, 1.442695
    %v125 = vpow.pop %v124
    %v126 = vmul.f32 %v119, 1.442695
    %v127 = vpow.pop %v126
    %v128 = vadd.f32 %v121, 1.0
    %v129 = vadd.f32 %v123, 1.0
    %v130 = vadd.f32 %v125, 1.0
    %v131 = vadd.f32 %v127, 1.0
    %v132 = vrcp.pop %v128
    %v133 = vrcp.pop %v129
    %v134 = vrcp.pop %v130
    %v135 = vrcp.pop %v131
    %v136 = vmul.f32 %v121, %v132
    %v137 = vmul.f32 %v123, %v133
    %v138 = vmul.f32 %v125, %v134
    %v139 = vmul.f32 %v127, %v135
    %vm140 = vcmp.ge.f32.partialorder %v53, 0.0
    %vm141 = vcmp.ge.f32.partialorder %v54, 0.0
    %vm142 = vcmp.ge.f32.partialorder %v55, 0.0
    %vm143 = vcmp.ge.f32.partialorder %v56, 0.0
    %v144 = vsub.f32 1.0, %v136
    %v145 = vsub.f32 1.0, %v137
    %v146 = vsub.f32 1.0, %v138
    %v147 = vsub.f32 1.0, %v139
    %v148 = vsel %vm140, %v144, %v136
    %v149 = vsel %vm141, %v145, %v137
    %v150 = vsel %vm142, %v146, %v138
    %v151 = vsel %vm143, %v147, %v139
    %v152 = vmax.f32 %v53, 0.0
    %v153 = vmax.f32 %v54, 0.0
    %v154 = vmax.f32 %v55, 0.0
    %v155 = vmax.f32 %v56, 0.0
    %v156 = vmul.f32 %v53, %v108
    %v157 = vmul.f32 %v54, %v109
    %v158 = vmul.f32 %v55, %v110
    %v159 = vmul.f32 %v56, %v111
    %v160 = vsub.f32 %v152, %v156
    %v161 = vsub.f32 %v153, %v157
    %v162 = vsub.f32 %v154, %v158
    %v163 = vsub.f32 %v155, %v159
    %v164 = vadd.f32 %v121, 1.0
    %v165 = vlog2.pop %v164
    %v166 = vmul.f32 %v165, 0.6931472
    %v167 = vmul.f32 -0.5, %v121
    %v168 = vadd.f32 %v167, 1.0
    %v169 = vmul.f32 %v168, %v121
    %v170 = vand.u32 2147483647, %v121
    %vm171 = vcmp.lt.f32.partialorder %v170, 0.0004427343
    %v172 = vsel %vm171, %v169, %v166
    %v173 = vadd.f32 %v123, 1.0
    %v174 = vlog2.pop %v173
    %v175 = vmul.f32 %v174, 0.6931472
    %v176 = vmul.f32 -0.5, %v123
    %v177 = vadd.f32 %v176, 1.0
    %v178 = vmul.f32 %v177, %v123
    %v179 = vand.u32 2147483647, %v123
    %vm180 = vcmp.lt.f32.partialorder %v179, 0.0004427343
    %v181 = vsel %vm180, %v178, %v175
    %v182 = vadd.f32 %v125, 1.0
    %v183 = vlog2.pop %v182
    %v184 = vmul.f32 %v183, 0.6931472
    %v185 = vmul.f32 -0.5, %v125
    %v186 = vadd.f32 %v185, 1.0
    %v187 = vmul.f32 %v186, %v125
    %v188 = vand.u32 2147483647, %v125
    %vm189 = vcmp.lt.f32.partialorder %v188, 0.0004427343
    %v190 = vsel %vm189, %v187, %v184
    %v191 = vadd.f32 %v127, 1.0
    %v192 = vlog2.pop %v191
    %v193 = vmul.f32 %v192, 0.6931472
    %v194 = vmul.f32 -0.5, %v127
    %v195 = vadd.f32 %v194, 1.0
    %v196 = vmul.f32 %v195, %v127
    %v197 = vand.u32 2147483647, %v127
    %vm198 = vcmp.lt.f32.partialorder %v197, 0.0004427343
    %v199 = vsel %vm198, %v196, %v193
    %v200 = vadd.f32 %v160, %v172
    %v201 = vadd.f32 %v161, %v181
    %v202 = vadd.f32 %v162, %v190
    %v203 = vadd.f32 %v163, %v199
    %v204 = vmul.f32 %v148, %v108
    %v205 = vmul.f32 %v149, %v109
    %v206 = vmul.f32 %v150, %v110
    %v207 = vmul.f32 %v151, %v111
    %v208 = vsub.f32 1.0, %v148
    %v209 = vsub.f32 1.0, %v149
    %v210 = vsub.f32 1.0, %v150
    %v211 = vsub.f32 1.0, %v151
    %v212 = vsub.f32 1.0, %v108
    %v213 = vsub.f32 1.0, %v109
    %v214 = vsub.f32 1.0, %v110
    %v215 = vsub.f32 1.0, %v111
    %v216 = vmul.f32 %v208, %v212
    %v217 = vmul.f32 %v209, %v213
    %v218 = vmul.f32 %v210, %v214
    %v219 = vmul.f32 %v211, %v215
    %v220 = vadd.f32 %v204, %v216
    %v221 = vadd.f32 %v205, %v217
    %v222 = vadd.f32 %v206, %v218
    %v223 = vadd.f32 %v207, %v219
    %v224 = vsub.f32 1.0, %v220
    %v225 = vsub.f32 1.0, %v221
    %v226 = vsub.f32 1.0, %v222
    %v227 = vsub.f32 1.0, %v223
    %v228 = vmul.f32 %v224, %v224
    %v229 = vmul.f32 %v225, %v225
    %v230 = vmul.f32 %v226, %v226
    %v231 = vmul.f32 %v227, %v227
    %v232 = vmul.f32 %v200, %v228
    %v233 = vmul.f32 %v201, %v229
    %v234 = vmul.f32 %v202, %v230
    %v235 = vmul.f32 %v203, %v231
    %v236 = vmul.f32 %v108, 0.25
    %v237 = vmul.f32 %v109, 0.25
    %v238 = vmul.f32 %v110, 0.25
    %v239 = vmul.f32 %v111, 0.25
    %v240 = vmul.f32 %v212, 0.75
    %v241 = vmul.f32 %v213, 0.75
    %v242 = vmul.f32 %v214, 0.75
    %v243 = vmul.f32 %v215, 0.75
    %v244 = vadd.f32 %v236, %v240
    %v245 = vadd.f32 %v237, %v241
    %v246 = vadd.f32 %v238, %v242
    %v247 = vadd.f32 %v239, %v243
    %v248 = vmul.f32 %v244, %v232
    %v249 = vmul.f32 %v245, %v233
    %v250 = vmul.f32 %v246, %v234
    %v251 = vmul.f32 %v247, %v235
    %v252 = vsel %vm84, %v248, 0.0
    %v253 = vsel %vm85, %v249, 0.0
    %v254 = vsel %vm86, %v250, 0.0
    %v255 = vsel %vm87, %v251, 0.0
    %v256 = vadd.f32 %v252, %v253
    %v257 = vadd.f32 %v256, %v254
    %v258 = vadd.f32 %v257, %v255
    %v259 = vld [vmem:[#allocation2] sm:$0xff]
    %v260 = vadd.f32 %v259, %v258
    %261 = vst [vmem:[#allocation2] sm:$0xff] %v260
    // Predicated region
    $region22: #{tpu_custom_call.1} parent=1 // pred_check
      %p262 = pneg %p48
    $region23: #{tpu_custom_call.1} parent=1 // pred_check_branch
      %264 = sbr.rel (%p262) target = $region25
    $region24: #{tpu_custom_call.1} parent=1 // pred_region
      %v265 = vld [vmem:[#allocation2] sm:$0xff]
      %266 = vst [vmem:[#allocation8] sm:$0xff] %v265
    $region25: #{tpu_custom_call.1} parent=1 // pred_fallthru
      _
    // Predicated region
    $region26: #{tpu_custom_call.1} parent=1 // pred_check
      _
    $region27: #{tpu_custom_call.1} parent=1 // pred_check_branch
      %268 = sbr.rel (0) target = $region29
    $region28: #{tpu_custom_call.1} parent=1 // pred_region
      %s270 = ssub.s32 128, 128
      %271 = vsyncadd [#allocation5], %s270
      %s273 = sshll.u32 [#allocation8], 4
      %s274 = int_to_ptr.vmem [resolvable:$true] %s273
      %276 = dma.vmem_to_hbm [thread:$0]  %s274, 128, %s2, [#allocation5]
    $region29: #{tpu_custom_call.1} parent=1 // pred_fallthru
      _
    // Predicated region
    $region30: #{tpu_custom_call.1} parent=1 // pred_check
      _
    $region31: #{tpu_custom_call.1} parent=1 // pred_check_branch
      %278 = sbr.rel (0) target = $region33
    $region32: #{tpu_custom_call.1} parent=1 // pred_region
      %279 = dma.done [#allocation5], 128
    $region33: #{tpu_custom_call.1} parent=1 // pred_fallthru
      _
    %280 = vsyncpa [#allocation4], 1
    %281 = vsyncpa [#allocation7], 1
    %282 = vsyncpa [#allocation5], 1

</llo_original>
